<compile_context>
chip_gen: v6e
topology: v6e:2x2x1
jax: 0.10.0
libtpu: 0.0.40
codegen_flags: <defaults>
</compile_context>

<pallas_src>
import functools

import jax
import jax.numpy as jnp
from jax.experimental import pallas as pl
from jax.experimental.pallas import tpu as pltpu


def _round_up(x, m):
    return (x + m - 1) // m * m


def _cdiv(a, b):
    return -(-a // b)


def mlp_kernel(x_ref, w1_ref, b1_ref, w2_ref, b2_ref, o_ref):
    """Fused  out = relu(x @ W1 + b1) @ W2 + b2  on one VMEM-resident tile."""
    x = x_ref[...]
    # In-kernel cast of the streamed activations (VPU): avoids a separate
    # wrapper-side HBM read+write of x when compute_dtype != x.dtype.
    if x.dtype != w1_ref.dtype:
        x = x.astype(w1_ref.dtype)
    h = jnp.dot(x, w1_ref[...], preferred_element_type=jnp.float32)
    h = jnp.maximum(h + b1_ref[...], 0.0)          # bias + ReLU in f32 on the VPU
    # Only downcast the f32 hidden activation if the weights are narrower
    # (e.g. bf16 on v6e/v7x); otherwise this is a no-op and is removed.
    if h.dtype != w2_ref.dtype:
        h = h.astype(w2_ref.dtype)
    out = jnp.dot(h, w2_ref[...], preferred_element_type=jnp.float32)
    # Fused downcast to the real output dtype — no wrapper-side cast pass.
    o_ref[...] = (out + b2_ref[...]).astype(o_ref.dtype)
    # TODO(synk): for very large n_hidden, add an "arbitrary" grid axis over H
    # with an f32 output accumulator instead of materializing all of h in VMEM.


def _resident_spec(block_shape, single_buffer):
    """BlockSpec for tensors whose block never changes across grid steps.

    With single_buffer=True, request a single VMEM buffer (no double
    buffering): the index_map is constant so a second buffer only wastes VMEM
    (matters on v7x, which has 64 MiB VMEM / 32 MiB scoped default).
    """
    if single_buffer and hasattr(pl, "Buffered"):
        try:
            return pl.BlockSpec(block_shape, lambda i: (0, 0),
                                pipeline_mode=pl.Buffered(1))
        except TypeError:
            pass
    return pl.BlockSpec(block_shape, lambda i: (0, 0))


def net_mlp_forward(x, w1, b1, w2, b2, *, compute_dtype=None, num_cores=None,
                    vmem_budget_bytes=16 * 1024 * 1024, vmem_limit_bytes=None,
                    single_buffer_resident=False):
    """Fused MLP forward.

    x: (B, F); w1: (F, H); b1: (1, H); w2: (H, O); b2: (1, O)  ->  (B, O)

    compute_dtype: optionally run the two dots in a narrower dtype (e.g.
    jnp.bfloat16 on v6e/v7x for MXU throughput).  Weights are pre-cast once in
    the wrapper (reused); x is cast inside the kernel; accumulation, bias adds
    and ReLU always stay in float32.
    num_cores: TensorCores to shard the batch grid over (v7x: 2).  Auto-detect
    falls back to 1 (single-TC v5e/v6e behaviour: one big gridless block).
    """
    B, F = x.shape
    H = w1.shape[1]
    O = w2.shape[1]
    out_dtype = x.dtype

    # One-time cast of the (reused) weights; x is cast inside the kernel.
    if compute_dtype is not None:
        w1 = w1.astype(compute_dtype)
        w2 = w2.astype(compute_dtype)
    # Biases are added to f32 accumulators; keep them f32 and 2-D.
    b1 = b1.astype(jnp.float32).reshape(1, H)
    b2 = b2.astype(jnp.float32).reshape(1, O)

    if num_cores is None:
        try:
            num_cores = max(1, int(getattr(jax.devices()[0], "num_cores", 1) or 1))
        except Exception:  # pragma: no cover - defensive
            num_cores = 1

    x_isz = jnp.dtype(x.dtype).itemsize
    w_isz = jnp.dtype(w1.dtype).itemsize
    o_isz = jnp.dtype(out_dtype).itemsize

    # --- VMEM-aware batch tiling (estimates use the internal (8,128) layout) ---
    Fp, Hp, Op = _round_up(F, 128), _round_up(H, 128), _round_up(O, 128)
    # Per batch-row: x tile (2 bufs) + f32 hidden act + f32 acc + out tile (2 bufs).
    per_row = 2 * Fp * x_isz + Hp * 4 + Op * 4 + 2 * Op * o_isz
    # Resident weights/biases (assume 2 buffers to stay conservative).
    resident = 2 * ((_round_up(F, 8) * Hp + _round_up(H, 8) * Op) * w_isz
                    + 8 * (Hp + Op) * 4)
    rows_cap = max(8, ((max(vmem_budget_bytes - resident, per_row)) // per_row) // 8 * 8)

    B8 = _round_up(B, 8)
    n_blocks = max(1, _cdiv(B8, rows_cap))
    if num_cores > 1 and B8 >= 256 * num_cores:
        # Keep >=1 block per TensorCore so "parallel" semantics use every core.
        n_blocks = max(n_blocks, num_cores)
    if num_cores > 1 and n_blocks > 1:
        n_blocks = _round_up(n_blocks, num_cores)
    step = num_cores if num_cores > 1 else 1
    TB = _round_up(_cdiv(B, n_blocks), 8)
    while TB > rows_cap and TB > 8:
        n_blocks += step
        TB = _round_up(_cdiv(B, n_blocks), 8)

    flops = 2 * B * (F * H + H * O)
    bytes_accessed = (B * F * x_isz + (F * H + H * O) * w_isz
                      + (H + O) * 4 + B * O * o_isz)
    cost = pl.CostEstimate(flops=flops, transcendentals=0,
                           bytes_accessed=bytes_accessed)

    cp_kwargs = {}
    if vmem_limit_bytes is not None:
        cp_kwargs["vmem_limit_bytes"] = vmem_limit_bytes

    if n_blocks == 1:
        # Gridless path (single-TC sweet spot): everything in one full-array
        # VMEM block, no per-grid-step overhead, no padding or slicing passes.
        call_kwargs = dict(
            out_shape=jax.ShapeDtypeStruct((B, O), out_dtype),
            in_specs=[pl.BlockSpec(memory_space=pltpu.MemorySpace.VMEM)] * 5,
            out_specs=pl.BlockSpec(memory_space=pltpu.MemorySpace.VMEM),
            cost_estimate=cost,
        )
        if cp_kwargs:
            call_kwargs["compiler_params"] = pltpu.CompilerParams(**cp_kwargs)
        return pl.pallas_call(mlp_kernel, **call_kwargs)(x, w1, b1, w2, b2)

    # Pipelined batch grid: x / out tiles stream (double-buffered); weights and
    # biases have constant index maps so they stay VMEM-resident across steps.
    Bp = TB * n_blocks
    xp = jnp.pad(x, ((0, Bp - B), (0, 0))) if Bp != B else x

    out = pl.pallas_call(
        mlp_kernel,
        out_shape=jax.ShapeDtypeStruct((Bp, O), out_dtype),
        grid_spec=pltpu.PrefetchScalarGridSpec(
            num_scalar_prefetch=0,
            grid=(n_blocks,),
            in_specs=[
                pl.BlockSpec((TB, F), lambda i: (i, 0)),
                _resident_spec((F, H), single_buffer_resident),
                _resident_spec((1, H), single_buffer_resident),
                _resident_spec((H, O), single_buffer_resident),
                _resident_spec((1, O), single_buffer_resident),
            ],
            out_specs=pl.BlockSpec((TB, O), lambda i: (i, 0)),
        ),
        compiler_params=pltpu.CompilerParams(
            dimension_semantics=("parallel",), **cp_kwargs),
        cost_estimate=cost,
    )(xp, w1, b1, w2, b2)
    return out[:B] if Bp != B else out


def init_params(key, n_feature, n_hidden, n_output, dtype=jnp.float32):
    """Deterministic init mirroring torch.nn.Linear's U(-1/sqrt(fan_in), 1/sqrt(fan_in))."""
    k1, k2, k3, k4 = jax.random.split(key, 4)
    bound1 = 1.0 / jnp.sqrt(n_feature)
    bound2 = 1.0 / jnp.sqrt(n_hidden)
    # Stored already transposed: (in_features, out_features).
    w1 = jax.random.uniform(k1, (n_feature, n_hidden), dtype, -bound1, bound1)
    b1 = jax.random.uniform(k2, (1, n_hidden), dtype, -bound1, bound1)
    w2 = jax.random.uniform(k3, (n_hidden, n_output), dtype, -bound2, bound2)
    b2 = jax.random.uniform(k4, (1, n_output), dtype, -bound2, bound2)
    return w1, b1, w2, b2


def _reference(x, w1, b1, w2, b2):
    return jnp.maximum(x @ w1 + b1, 0.0) @ w2 + b2


if __name__ == "__main__":
    key = jax.random.PRNGKey(0)
    n_feature, n_hidden, n_output = 32, 64, 16

    kx, kp, kx2, kx3 = jax.random.split(key, 4)
    w1, b1, w2, b2 = init_params(kp, n_feature, n_hidden, n_output)

    fwd_auto = jax.jit(net_mlp_forward)
    fwd_2core = jax.jit(functools.partial(net_mlp_forward, num_cores=2))

    # --- Small batch: gridless single-VMEM-block path. ---
    x = jax.random.normal(kx, (8, n_feature), jnp.float32)
    out = jax.block_until_ready(fwd_auto(x, w1, b1, w2, b2))
    ref = _reference(x, w1, b1, w2, b2)
    assert out.shape == (8, n_output) and out.dtype == x.dtype
    assert jnp.allclose(out, ref, atol=1e-5, rtol=1e-5)

    # --- Large batch, auto core count (single-TC => still gridless, VMEM-fit). ---
    xb = jax.random.normal(kx2, (2048, n_feature), jnp.float32)
    refb = _reference(xb, w1, b1, w2, b2)
    outb = jax.block_until_ready(fwd_auto(xb, w1, b1, w2, b2))
    assert outb.shape == (2048, n_output)
    assert jnp.allclose(outb, refb, atol=1e-5, rtol=1e-5)

    # --- Large batch, forced 2 cores: "parallel" batch grid (2 x 1024 tiles). ---
    outb2 = jax.block_until_ready(fwd_2core(xb, w1, b1, w2, b2))
    assert outb2.shape == (2048, n_output)
    assert jnp.allclose(outb2, refb, atol=1e-5, rtol=1e-5)

    # --- Ragged batch on the grid path: <8 rows of padding, sliced off. ---
    xr = jax.random.normal(kx3, (520, n_feature), jnp.float32)
    outr = jax.block_until_ready(fwd_2core(xr, w1, b1, w2, b2))
    refr = _reference(xr, w1, b1, w2, b2)
    assert outr.shape == (520, n_output)
    assert jnp.allclose(outr, refr, atol=1e-5, rtol=1e-5)

    print("KERNEL_OK")
</pallas_src>

<mosaic_0001>
module attributes {stable_mosaic.version = 11 : i64} {
  func.func @mlp_kernel(%arg0: memref<8x32xf32, #tpu.memory_space<vmem>>, %arg1: memref<32x64xf32, #tpu.memory_space<vmem>>, %arg2: memref<1x64xf32, #tpu.memory_space<vmem>>, %arg3: memref<64x16xf32, #tpu.memory_space<vmem>>, %arg4: memref<1x16xf32, #tpu.memory_space<vmem>>, %arg5: memref<8x16xf32, #tpu.memory_space<vmem>>) attributes {dimension_semantics = [], scalar_prefetch = 0 : i64, scratch_operands = 0 : i64, tpu.core_type = #tpu.core_type<tc>} {
    %c0 = arith.constant 0 : index
    %c0_0 = arith.constant 0 : index
    %0 = vector.load %arg0[%c0, %c0_0] : memref<8x32xf32, #tpu.memory_space<vmem>>, vector<8x32xf32>
    %c0_1 = arith.constant 0 : index
    %c0_2 = arith.constant 0 : index
    %1 = vector.load %arg1[%c0_1, %c0_2] : memref<32x64xf32, #tpu.memory_space<vmem>>, vector<32x64xf32>
    %cst = arith.constant dense<0.000000e+00> : vector<8x64xf32>
    %2 = tpu.matmul %0, %1, %cst {dimension_numbers = #tpu.dot_dimension_numbers<[1], [0], [0], [1], [0, 0, 1, 1], [], []>} : vector<8x32xf32>, vector<32x64xf32>, vector<8x64xf32> -> vector<8x64xf32>
    %c0_3 = arith.constant 0 : index
    %c0_4 = arith.constant 0 : index
    %3 = vector.load %arg2[%c0_3, %c0_4] : memref<1x64xf32, #tpu.memory_space<vmem>>, vector<1x64xf32>
    %4 = vector.broadcast %3 : vector<1x64xf32> to vector<8x64xf32>
    %5 = arith.addf %2, %4 : vector<8x64xf32>
    %cst_5 = arith.constant 0.000000e+00 : f32
    %6 = vector.broadcast %cst_5 : f32 to vector<8x64xf32>
    %7 = arith.maximumf %5, %6 : vector<8x64xf32>
    %c0_6 = arith.constant 0 : index
    %c0_7 = arith.constant 0 : index
    %8 = vector.load %arg3[%c0_6, %c0_7] : memref<64x16xf32, #tpu.memory_space<vmem>>, vector<64x16xf32>
    %cst_8 = arith.constant dense<0.000000e+00> : vector<8x16xf32>
    %9 = tpu.matmul %7, %8, %cst_8 {dimension_numbers = #tpu.dot_dimension_numbers<[1], [0], [0], [1], [0, 0, 1, 1], [], []>} : vector<8x64xf32>, vector<64x16xf32>, vector<8x16xf32> -> vector<8x16xf32>
    %c0_9 = arith.constant 0 : index
    %c0_10 = arith.constant 0 : index
    %10 = vector.load %arg4[%c0_9, %c0_10] : memref<1x16xf32, #tpu.memory_space<vmem>>, vector<1x16xf32>
    %11 = vector.broadcast %10 : vector<1x16xf32> to vector<8x16xf32>
    %12 = arith.addf %9, %11 : vector<8x16xf32>
    %c0_11 = arith.constant 0 : index
    %c0_12 = arith.constant 0 : index
    %13 = vector.load %arg5[%c0_11, %c0_12] : memref<8x16xf32, #tpu.memory_space<vmem>>, vector<8x16xf32>
    tpu.vector_store %arg5[%c0_11, %c0_12], %12 {strides = array<i32>} : memref<8x16xf32, #tpu.memory_space<vmem>>, vector<8x16xf32>,
    return
  }
}

</mosaic_0001>

<llo_original>
// kernel: net_mlp_forward.1
$region0: #{net_mlp_forward.1}
  #allocation0 [shape = 'u32[]', space=smem, size = 0x4, offset = 0x4, fixed_abs, tag = 'smem constant byte address 0x4 - core index']
  #allocation1 [shape = 'u32[144,128]{1,0:T(1,128)}', space=vmem, size = 0x12000, scoped, tag = 'internal scratch']
  %s0 = inlined_call_operand.vmem [shape: f32[8,32], index: 0, kind: input, shape index: {}]
  %s1 = inlined_call_operand.vmem [shape: f32[32,64], index: 1, kind: input, shape index: {}]
  %s2 = inlined_call_operand.vmem [shape: f32[1,64], index: 2, kind: input, shape index: {}]
  %s3 = inlined_call_operand.vmem [shape: f32[64,16], index: 3, kind: input, shape index: {}]
  %s4 = inlined_call_operand.vmem [shape: f32[1,16], index: 4, kind: input, shape index: {}]
  %s5 = inlined_call_operand.hbm [shape: f32[8,16], index: 5, kind: output, shape index: {}]
  %s6 = sld [smem:[#allocation0]]
  $region30: #{net_mlp_forward.1} parent=0
    _
  %s8 = ssub.s32 1, %s6
  %s9 = scalar_select 0, %s8, %s6
  $region1: #{net_mlp_forward.1} parent=0
    #allocation2 [shape = 'u8[4096]{0}', space=vmem, size = 0x1000, scoped, tag = 'output window, operand 0, single buffered']
    #allocation3 [shape = 's32[1]{0}', space=sflag, size = 0x4, scoped, tag = 'scoped memory for net_mlp_forward.1']
    %10 = vsyncpa [#allocation3], 0
    // Predicated region
    $region2: #{net_mlp_forward.1} parent=1 // pred_check
      _
    $region3: #{net_mlp_forward.1} parent=1 // pred_check_branch
      %12 = sbr.rel (0) target = $region5
    $region4: #{net_mlp_forward.1} parent=1 // pred_region
      _
    $region5: #{net_mlp_forward.1} parent=1 // pred_fallthru
      _
    // Predicated region
    $region6: #{net_mlp_forward.1} parent=1 // pred_check
      _
    $region7: #{net_mlp_forward.1} parent=1 // pred_check_branch
      %14 = sbr.rel (0) target = $region9
    $region8: #{net_mlp_forward.1} parent=1 // pred_region
      _
    $region9: #{net_mlp_forward.1} parent=1 // pred_fallthru
      _
    // Predicated region
    $region10: #{net_mlp_forward.1} parent=1 // pred_check
      _
    $region11: #{net_mlp_forward.1} parent=1 // pred_check_branch
      %16 = sbr.rel (0) target = $region13
    $region12: #{net_mlp_forward.1} parent=1 // pred_region
      _
    $region13: #{net_mlp_forward.1} parent=1 // pred_fallthru
      _
    // Predicated region
    $region14: #{net_mlp_forward.1} parent=1 // pred_check
      _
    $region15: #{net_mlp_forward.1} parent=1 // pred_check_branch
      %18 = sbr.rel (0) target = $region17
    $region16: #{net_mlp_forward.1} parent=1 // pred_region
      _
    $region17: #{net_mlp_forward.1} parent=1 // pred_fallthru
      _
    // Predicated region
    $region18: #{net_mlp_forward.1} parent=1 // pred_check
      _
    $region19: #{net_mlp_forward.1} parent=1 // pred_check_branch
      %20 = sbr.rel (0) target = $region21
    $region20: #{net_mlp_forward.1} parent=1 // pred_region
      _
    $region21: #{net_mlp_forward.1} parent=1 // pred_fallthru
      _
    %v21 = vld [vmem:[%s0] sm:$0xff]
    %v22 = vld [vmem:[%s1] sm:$0xff]
    %v23 = vld [vmem:[%s1 + $0x8] sm:$0xff]
    %v24 = vld [vmem:[%s1 + $0x10] sm:$0xff]
    %v25 = vld [vmem:[%s1 + $0x18] sm:$0xff]
    %v26 = vld [vmem:[%s2] sm:$0x1]
    %v28 = vlaneseq
    %v29 = vshrl.u32 %v28, 7
    %v30 = vsub.s32 0, %v29
    %v31 = vrot.slane %v26, %v30
    %vm33 = vcmask 261120
    %v35 = vsel %vm33, %v21, 0
    %37 = vmatprep.subr.mxu0 0.0
    %38 = vmatpush1.msra.mxu0 0.0
    %39 = vmatprep.subr.mxu0 0.0
    %40 = vmatpush1.msra.mxu0 0.0
    %41 = vmatprep.subr.mxu0 0.0
    %42 = vmatpush1.msra.mxu0 0.0
    %43 = vmatprep.subr.mxu0 0.0
    %44 = vmatpush1.msra.mxu0 0.0
    %45 = vmatprep.subr.mxu0 0.0
    %46 = vmatpush1.msra.mxu0 0.0
    %47 = vmatprep.subr.mxu0 0.0
    %48 = vmatpush1.msra.mxu0 0.0
    %49 = vmatprep.subr.mxu0 0.0
    %50 = vmatpush1.msra.mxu0 0.0
    %51 = vmatprep.subr.mxu0 0.0
    %52 = vmatpush1.msra.mxu0 0.0
    %53 = vmatprep.subr.mxu0 0.0
    %54 = vmatpush1.msra.mxu0 0.0
    %55 = vmatprep.subr.mxu0 0.0
    %56 = vmatpush1.msra.mxu0 0.0
    %57 = vmatprep.subr.mxu0 0.0
    %58 = vmatpush1.msra.mxu0 0.0
    %59 = vmatprep.subr.mxu0 0.0
    %60 = vmatpush1.msra.mxu0 0.0
    %61 = vmatprep.subr.mxu0 0.0
    %62 = vmatpush1.msra.mxu0 %v25
    %63 = vmatprep.subr.mxu0 0.0
    %64 = vmatpush1.msra.mxu0 %v24
    %65 = vmatprep.subr.mxu0 0.0
    %66 = vmatpush1.msra.mxu0 %v23
    %67 = vmatprep.subr.mxu0 0.0
    %68 = vmatpush1.msra.mxu0 %v22
    %69 = vmatprep.subr.mxu0 0.0
    %70 = vmatpush2.msra.mxu0 0.0
    %71 = vmatprep.subr.mxu0 0.0
    %72 = vmatpush2.msra.mxu0 0.0
    %73 = vmatprep.subr.mxu0 0.0
    %74 = vmatpush2.msra.mxu0 0.0
    %75 = vmatprep.subr.mxu0 0.0
    %76 = vmatpush2.msra.mxu0 0.0
    %77 = vmatprep.subr.mxu0 0.0
    %78 = vmatpush2.msra.mxu0 0.0
    %79 = vmatprep.subr.mxu0 0.0
    %80 = vmatpush2.msra.mxu0 0.0
    %81 = vmatprep.subr.mxu0 0.0
    %82 = vmatpush2.msra.mxu0 0.0
    %83 = vmatprep.subr.mxu0 0.0
    %84 = vmatpush2.msra.mxu0 0.0
    %85 = vmatprep.subr.mxu0 0.0
    %86 = vmatpush2.msra.mxu0 0.0
    %87 = vmatprep.subr.mxu0 0.0
    %88 = vmatpush2.msra.mxu0 0.0
    %89 = vmatprep.subr.mxu0 0.0
    %90 = vmatpush2.msra.mxu0 0.0
    %91 = vmatprep.subr.mxu0 0.0
    %92 = vmatpush2.msra.mxu0 0.0
    %93 = vmatprep.subr.mxu0 0.0
    %94 = vmatpush2.msra.mxu0 0.0
    %95 = vmatprep.subr.mxu0 0.0
    %96 = vmatpush2.msra.mxu0 0.0
    %97 = vmatprep.subr.mxu0 0.0
    %98 = vmatpush2.msra.mxu0 0.0
    %99 = vmatprep.subr.mxu0 0.0
    %100 = vmatpush2.msra.mxu0 0.0
    %101 = vmatprep.mubr.f32.mxu0 0.0
    %102 = vmatmul.mubr.f32.gmra.mxu0 %v35
    %v103 = vpop.f32.mrf.mxu0
    %v104 = vadd.f32 %v31, %v103
    %v105 = vpop.f32.mrf.mxu0
    %106 = vdwg.mxu0
    %v107 = vmax.f32 %v104, 0.0
    %v108 = vld [vmem:[%s3] sm:$0xff]
    %v109 = vld [vmem:[%s3 + $0x8] sm:$0xff]
    %v110 = vld [vmem:[%s3 + $0x10] sm:$0xff]
    %v111 = vld [vmem:[%s3 + $0x18] sm:$0xff]
    %v112 = vld [vmem:[%s3 + $0x20] sm:$0xff]
    %v113 = vld [vmem:[%s3 + $0x28] sm:$0xff]
    %v114 = vld [vmem:[%s3 + $0x30] sm:$0xff]
    %v115 = vld [vmem:[%s3 + $0x38] sm:$0xff]
    %v116 = vld [vmem:[%s4] sm:$0x1]
    %v118 = vlaneseq
    %v119 = vshrl.u32 %v118, 7
    %v120 = vsub.s32 0, %v119
    %v121 = vrot.slane %v116, %v120
    %vm123 = vcmask 523264
    %v125 = vsel %vm123, %v107, 0
    %127 = vmatprep.subr.mxu0 0.0
    %128 = vmatpush1.msra.mxu0 0.0
    %129 = vmatprep.subr.mxu0 0.0
    %130 = vmatpush1.msra.mxu0 0.0
    %131 = vmatprep.subr.mxu0 0.0
    %132 = vmatpush1.msra.mxu0 0.0
    %133 = vmatprep.subr.mxu0 0.0
    %134 = vmatpush1.msra.mxu0 0.0
    %135 = vmatprep.subr.mxu0 0.0
    %136 = vmatpush1.msra.mxu0 0.0
    %137 = vmatprep.subr.mxu0 0.0
    %138 = vmatpush1.msra.mxu0 0.0
    %139 = vmatprep.subr.mxu0 0.0
    %140 = vmatpush1.msra.mxu0 0.0
    %141 = vmatprep.subr.mxu0 0.0
    %142 = vmatpush1.msra.mxu0 0.0
    %143 = vmatprep.subr.mxu0 0.0
    %144 = vmatpush1.msra.mxu0 %v115
    %145 = vmatprep.subr.mxu0 0.0
    %146 = vmatpush1.msra.mxu0 %v114
    %147 = vmatprep.subr.mxu0 0.0
    %148 = vmatpush1.msra.mxu0 %v113
    %149 = vmatprep.subr.mxu0 0.0
    %150 = vmatpush1.msra.mxu0 %v112
    %151 = vmatprep.subr.mxu0 0.0
    %152 = vmatpush1.msra.mxu0 %v111
    %153 = vmatprep.subr.mxu0 0.0
    %154 = vmatpush1.msra.mxu0 %v110
    %155 = vmatprep.subr.mxu0 0.0
    %156 = vmatpush1.msra.mxu0 %v109
    %157 = vmatprep.subr.mxu0 0.0
    %158 = vmatpush1.msra.mxu0 %v108
    %159 = vmatprep.subr.mxu0 0.0
    %160 = vmatpush2.msra.mxu0 0.0
    %161 = vmatprep.subr.mxu0 0.0
    %162 = vmatpush2.msra.mxu0 0.0
    %163 = vmatprep.subr.mxu0 0.0
    %164 = vmatpush2.msra.mxu0 0.0
    %165 = vmatprep.subr.mxu0 0.0
    %166 = vmatpush2.msra.mxu0 0.0
    %167 = vmatprep.subr.mxu0 0.0
    %168 = vmatpush2.msra.mxu0 0.0
    %169 = vmatprep.subr.mxu0 0.0
    %170 = vmatpush2.msra.mxu0 0.0
    %171 = vmatprep.subr.mxu0 0.0
    %172 = vmatpush2.msra.mxu0 0.0
    %173 = vmatprep.subr.mxu0 0.0
    %174 = vmatpush2.msra.mxu0 0.0
    %175 = vmatprep.subr.mxu0 0.0
    %176 = vmatpush2.msra.mxu0 0.0
    %177 = vmatprep.subr.mxu0 0.0
    %178 = vmatpush2.msra.mxu0 0.0
    %179 = vmatprep.subr.mxu0 0.0
    %180 = vmatpush2.msra.mxu0 0.0
    %181 = vmatprep.subr.mxu0 0.0
    %182 = vmatpush2.msra.mxu0 0.0
    %183 = vmatprep.subr.mxu0 0.0
    %184 = vmatpush2.msra.mxu0 0.0
    %185 = vmatprep.subr.mxu0 0.0
    %186 = vmatpush2.msra.mxu0 0.0
    %187 = vmatprep.subr.mxu0 0.0
    %188 = vmatpush2.msra.mxu0 0.0
    %189 = vmatprep.subr.mxu0 0.0
    %190 = vmatpush2.msra.mxu0 0.0
    %191 = vmatprep.mubr.f32.mxu0 0.0
    %192 = vmatmul.mubr.f32.gmra.mxu0 %v125
    %v193 = vpop.f32.mrf.mxu0
    %v194 = vadd.f32 %v121, %v193
    %v195 = vpop.f32.mrf.mxu0
    %196 = vdwg.mxu0
    %vm197 = vcmask 130048
    %198 = vst.msk [vmem:[#allocation2] sm:$0xff] %vm197, %v194
    // Predicated region
    $region22: #{net_mlp_forward.1} parent=1 // pred_check
      _
    $region23: #{net_mlp_forward.1} parent=1 // pred_check_branch
      %200 = sbr.rel (0) target = $region25
    $region24: #{net_mlp_forward.1} parent=1 // pred_region
      %s202 = ssub.s32 128, 128
      %203 = vsyncadd [#allocation3], %s202
      %s205 = sshll.u32 [#allocation2], 4
      %s206 = int_to_ptr.vmem [resolvable:$true] %s205
      %208 = dma.vmem_to_hbm [thread:$0]  %s206, 128, %s5, [#allocation3]
    $region25: #{net_mlp_forward.1} parent=1 // pred_fallthru
      _
    // Predicated region
    $region26: #{net_mlp_forward.1} parent=1 // pred_check
      _
    $region27: #{net_mlp_forward.1} parent=1 // pred_check_branch
      %210 = sbr.rel (0) target = $region29
    $region28: #{net_mlp_forward.1} parent=1 // pred_region
      %211 = dma.done [#allocation3], 128
    $region29: #{net_mlp_forward.1} parent=1 // pred_fallthru
      _
    %212 = vsyncpa [#allocation3], 1

</llo_original>
